<compile_context>
chip_gen: v7x
topology: tpu7x:2x2x1
jax: 0.10.0
libtpu: 0.0.40
codegen_flags: <defaults>
</compile_context>

<pallas_src>
import functools

import jax
import jax.numpy as jnp
from jax.experimental import pallas as pl
from jax.experimental.pallas import tpu as pltpu

_LANES = 128


def _vmem_budget():
    """Generation-aware (VMEM-capacity-aware) budgets: scoped limit, fused slab cap, max S-tile rows."""
    cap = 64 * 1024 * 1024  # conservative fallback (v7x-sized)
    try:
        cap = int(getattr(pltpu.get_tpu_info(), "vmem_capacity_bytes", cap)) or cap
    except Exception:
        pass
    vmem_limit = min((cap * 3) // 4, 96 * 1024 * 1024)   # v5e/v6e: 96 MiB, v7x: 48 MiB
    fused_cap = min(12 * 1024 * 1024, vmem_limit // 8)   # v5e/v6e: 12 MiB, v7x: 6 MiB
    max_rows = 8192 if vmem_limit >= 64 * 1024 * 1024 else 4096
    return vmem_limit, fused_cap, max_rows


def _compiler_params(dimension_semantics, vmem_limit_bytes):
    return pltpu.CompilerParams(
        dimension_semantics=dimension_semantics,
        vmem_limit_bytes=int(vmem_limit_bytes),
    )


# --------------------- fused single-pass kernel (fits VMEM) ------------------

def _fused_kernel(gb_ref, x_ref, o_ref, *, eps, inv_count, n_batch):
    # gb_ref: (2, 128) f32; row0 = gamma per lane (re even / im odd lanes), row1 = beta.
    # x_ref / o_ref: (N, S, 128) -- the full per-channel slab, resident in VMEM.
    lane = jax.lax.broadcasted_iota(jnp.int32, (1, _LANES), 1)
    is_re = (lane % 2) == 0

    # Pass 1: lane sums / sums-of-squares, looping over N so f32 temps stay
    # capped at one (S, 128) slice (never a whole-slab f32 copy).
    def stats_body(n, carry):
        s_acc, q_acc = carry
        x = x_ref[n].astype(jnp.float32)                       # (S, 128)
        s_acc = s_acc + jnp.sum(x, axis=0, keepdims=True)
        q_acc = q_acc + jnp.sum(x * x, axis=0, keepdims=True)
        return s_acc, q_acc

    zeros = jnp.zeros((1, _LANES), jnp.float32)
    s_lane, q_lane = jax.lax.fori_loop(0, n_batch, stats_body, (zeros, zeros),
                                       unroll=n_batch <= 8)

    def comp_total(v):                                          # (1,128) -> (1,128)
        re = jnp.sum(jnp.where(is_re, v, 0.0), axis=-1, keepdims=True)
        im = jnp.sum(jnp.where(is_re, 0.0, v), axis=-1, keepdims=True)
        return jnp.where(is_re, re, im)

    inv_n = jnp.float32(inv_count)
    mean = comp_total(s_lane) * inv_n
    ex2 = comp_total(q_lane) * inv_n
    var = jnp.maximum(ex2 - mean * mean, 0.0)                   # biased variance (f32)
    inv_std = jax.lax.rsqrt(var + jnp.float32(eps))
    scale = gb_ref[0:1, :] * inv_std                            # (1,128)
    shift = gb_ref[1:2, :] - mean * scale

    # Pass 2: folded FMA, again one N-slice at a time.
    def apply_body(n, carry):
        x = x_ref[n].astype(jnp.float32)
        o_ref[n] = (x * scale + shift).astype(o_ref.dtype)
        return carry

    jax.lax.fori_loop(0, n_batch, apply_body, 0, unroll=n_batch <= 8)


# --------------------- two-pass kernels (large inputs) -----------------------

def _stats_kernel(x_ref, part_ref, *, s_total, s_tile):
    # x_ref: (S_tile, 128) tile of one channel.
    # part_ref: (2, 8, 128) resident per-channel accumulator:
    #   part_ref[0] = sublane-grouped lane sums, part_ref[1] = sums of squares.
    n = pl.program_id(1)
    s = pl.program_id(2)

    @pl.when(jnp.logical_and(n == 0, s == 0))
    def _():
        part_ref[...] = jnp.zeros_like(part_ref)

    x = x_ref[...].astype(jnp.float32)

    if s_total % s_tile != 0:
        # Ragged last S-tile: zero the out-of-bounds rows (zeros don't perturb sums).
        valid = s_total - s * s_tile
        rows = jax.lax.broadcasted_iota(jnp.int32, x.shape, 0)
        x = jnp.where(rows < valid, x, 0.0)

    if s_tile % 8 == 0:
        # Full (8,128)-tile accumulate -> unmasked vector stores every step.
        g = x.reshape(s_tile // 8, 8, _LANES)
        part_ref[0] += jnp.sum(g, axis=0)
        part_ref[1] += jnp.sum(g * g, axis=0)
    else:
        # Small / non-multiple-of-8 tiles (rare): plain row accumulate.
        part_ref[0, 0:1, :] += jnp.sum(x, axis=0, keepdims=True)
        part_ref[1, 0:1, :] += jnp.sum(x * x, axis=0, keepdims=True)


def _apply_kernel(gb_ref, part_ref, x_ref, o_ref, coef_ref, *, eps, inv_count):
    # gb_ref: (2,128) gamma/beta per lane; part_ref: (2,8,128) per-channel stats
    # (both resident across the inner grid axes); coef_ref: (2,128) VMEM scratch.
    n = pl.program_id(1)
    s = pl.program_id(2)

    @pl.when(jnp.logical_and(n == 0, s == 0))
    def _():
        # Finalize the reduction and fold scale/shift ONCE per channel (fused
        # into the apply pass: no partials->coefs HBM round trip, no XLA glue).
        s_lane = jnp.sum(part_ref[0], axis=0, keepdims=True)    # (1,128)
        q_lane = jnp.sum(part_ref[1], axis=0, keepdims=True)
        lane = jax.lax.broadcasted_iota(jnp.int32, (1, _LANES), 1)
        is_re = (lane % 2) == 0

        def comp_total(v):
            re = jnp.sum(jnp.where(is_re, v, 0.0), axis=-1, keepdims=True)
            im = jnp.sum(jnp.where(is_re, 0.0, v), axis=-1, keepdims=True)
            return jnp.where(is_re, re, im)

        inv_n = jnp.float32(inv_count)
        mean = comp_total(s_lane) * inv_n
        ex2 = comp_total(q_lane) * inv_n
        var = jnp.maximum(ex2 - mean * mean, 0.0)
        inv_std = jax.lax.rsqrt(var + jnp.float32(eps))
        scale = gb_ref[0:1, :] * inv_std
        shift = gb_ref[1:2, :] - mean * scale
        coef_ref[0:1, :] = scale
        coef_ref[1:2, :] = shift

    x = x_ref[...].astype(jnp.float32)
    o_ref[...] = (x * coef_ref[0:1, :] + coef_ref[1:2, :]).astype(o_ref.dtype)


def _pick_s_tile(s_total, max_rows):
    # Whole row if it fits; otherwise the largest multiple-of-8 divisor not far
    # below the cap; otherwise a ragged (cdiv) tiling masked in the stats kernel.
    if s_total <= max_rows:
        return s_total
    top = (max_rows // 8) * 8
    for t in range(top, max(top // 2, 8) - 1, -8):
        if s_total % t == 0:
            return t
    return top  # ragged last tile; stats kernel masks, apply stores are clipped by Pallas


# ------------------------------- wrapper -------------------------------------

@functools.partial(jax.jit, static_argnames=("eps", "single_pass_max_bytes"))
def complex_batchnorm2d(x, gamma_re, beta_re, gamma_im, beta_im, eps=1e-5,
                        single_pass_max_bytes=None):
    """x: [N, C, H, W, 2]. Returns the same shape/dtype (training-mode forward)."""
    N, C, H, W, two = x.shape
    assert two == 2
    L = H * W * 2
    Lp = ((L + _LANES - 1) // _LANES) * _LANES
    x3 = x.reshape(N, C, L)                          # free, contiguous reshape
    if Lp != L:
        # Zero padding does not perturb sums / sums-of-squares; statistics
        # divide by the true count N*H*W.  Parity is preserved (128 is even).
        x3 = jnp.pad(x3, ((0, 0), (0, 0), (0, Lp - L)))
    S = Lp // _LANES
    x4 = x3.reshape(N, C, S, _LANES)                 # free, contiguous reshape

    count = N * H * W
    itemsize = jnp.dtype(x.dtype).itemsize
    vmem_limit, fused_cap, max_rows = _vmem_budget()
    if single_pass_max_bytes is None:
        single_pass_max_bytes = fused_cap

    lane_is_re = (jnp.arange(_LANES) % 2) == 0       # even lanes = real component

    def lane_expand(a_re, a_im):                     # (C,), (C,) -> (C, 128) f32
        return jnp.where(lane_is_re[None, :],
                         a_re[:, None].astype(jnp.float32),
                         a_im[:, None].astype(jnp.float32))

    gb = jnp.stack([lane_expand(gamma_re, gamma_im),
                    lane_expand(beta_re, beta_im)], axis=1)          # (C,2,128) f32

    per_channel_bytes = N * S * _LANES * itemsize    # dtype-aware resident slab
    total_elems = N * C * S * _LANES

    if per_channel_bytes <= single_pass_max_bytes:
        # ---- single fused pass: read x once, write y once (2x HBM traffic) ----
        kernel = functools.partial(_fused_kernel, eps=float(eps),
                                   inv_count=1.0 / count, n_batch=N)
        cost = pl.CostEstimate(flops=5 * total_elems, transcendentals=2 * C,
                               bytes_accessed=2 * total_elems * itemsize + gb.size * 4)
        y4 = pl.pallas_call(
            kernel,
            out_shape=jax.ShapeDtypeStruct((N, C, S, _LANES), x.dtype),
            grid=(C,),
            in_specs=[
                pl.BlockSpec((None, 2, _LANES), lambda c: (c, 0, 0)),
                pl.BlockSpec((N, None, S, _LANES), lambda c: (0, c, 0, 0)),
            ],
            out_specs=pl.BlockSpec((N, None, S, _LANES), lambda c: (0, c, 0, 0)),
            compiler_params=_compiler_params(("parallel",), vmem_limit),
            cost_estimate=cost,
        )(gb, x4)
    else:
        # ---- two gridded, pipelined passes: stats, then normalize (3x traffic) ----
        S_tile = _pick_s_tile(S, max_rows)
        n_s = -(-S // S_tile)                        # cdiv: ragged last tile allowed
        grid = (C, N, n_s)                           # reduction axes (N, s) last
        x_spec = pl.BlockSpec((None, None, S_tile, _LANES),
                              lambda c, n, s: (n, c, s, 0))

        stats_kernel = functools.partial(_stats_kernel, s_total=S, s_tile=S_tile)
        stats_cost = pl.CostEstimate(
            flops=3 * total_elems, transcendentals=0,
            bytes_accessed=total_elems * itemsize + C * 2 * 8 * _LANES * 4)
        partials = pl.pallas_call(
            stats_kernel,
            out_shape=jax.ShapeDtypeStruct((C, 2, 8, _LANES), jnp.float32),
            grid=grid,
            in_specs=[x_spec],
            out_specs=pl.BlockSpec((None, 2, 8, _LANES), lambda c, n, s: (c, 0, 0, 0)),
            compiler_params=_compiler_params(("parallel", "arbitrary", "arbitrary"),
                                             vmem_limit),
            cost_estimate=stats_cost,
        )(x4)

        apply_kernel = functools.partial(_apply_kernel, eps=float(eps),
                                         inv_count=1.0 / count)
        apply_cost = pl.CostEstimate(
            flops=2 * total_elems, transcendentals=2 * C,
            bytes_accessed=2 * total_elems * itemsize + C * (2 * 8 + 2) * _LANES * 4)
        y4 = pl.pallas_call(
            apply_kernel,
            out_shape=jax.ShapeDtypeStruct((N, C, S, _LANES), x.dtype),
            grid=grid,
            in_specs=[
                pl.BlockSpec((None, 2, _LANES), lambda c, n, s: (c, 0, 0)),
                pl.BlockSpec((None, 2, 8, _LANES), lambda c, n, s: (c, 0, 0, 0)),
                x_spec,
            ],
            out_specs=x_spec,
            scratch_shapes=[pltpu.VMEM((2, _LANES), jnp.float32)],
            compiler_params=_compiler_params(("parallel", "arbitrary", "arbitrary"),
                                             vmem_limit),
            cost_estimate=apply_cost,
        )(gb, partials, x4)

    y3 = y4.reshape(N, C, Lp)
    if Lp != L:
        y3 = y3[:, :, :L]
    return y3.reshape(N, C, H, W, 2)


# ------------------------------- reference -----------------------------------

def _reference(x, gamma_re, beta_re, gamma_im, beta_im, eps=1e-5):
    def bn(xp, g, b):  # xp: [N, C, H, W]
        mean = jnp.mean(xp, axis=(0, 2, 3), keepdims=True)
        var = jnp.mean((xp - mean) ** 2, axis=(0, 2, 3), keepdims=True)
        return (xp - mean) / jnp.sqrt(var + eps) * g[None, :, None, None] + b[None, :, None, None]

    real = bn(x[..., 0], gamma_re, beta_re)
    imag = bn(x[..., 1], gamma_im, beta_im)
    return jnp.stack((real, imag), axis=-1)


if __name__ == "__main__":
    key = jax.random.PRNGKey(0)
    kx, kg1, kb1, kg2, kb2, kx2 = jax.random.split(key, 6)

    # --- shape 1: N=2, C=4, 16x16 (S=4) -------------------------------------
    N, C, H, W = 2, 4, 16, 16
    x = jax.random.normal(kx, (N, C, H, W, 2), dtype=jnp.float32) + 0.5
    gamma_re = 1.0 + 0.1 * jax.random.normal(kg1, (C,), dtype=jnp.float32)
    beta_re = 0.1 * jax.random.normal(kb1, (C,), dtype=jnp.float32)
    gamma_im = 1.0 + 0.1 * jax.random.normal(kg2, (C,), dtype=jnp.float32)
    beta_im = 0.1 * jax.random.normal(kb2, (C,), dtype=jnp.float32)
    ref = _reference(x, gamma_re, beta_re, gamma_im, beta_im)

    # fused single-pass path (default budget)
    out_fused = jax.block_until_ready(
        complex_batchnorm2d(x, gamma_re, beta_re, gamma_im, beta_im))
    assert out_fused.shape == (N, C, H, W, 2)
    assert jnp.allclose(out_fused, ref, atol=1e-4, rtol=1e-4)

    # forced two-pass (stats + fused-finalize apply) path
    out_tiled = jax.block_until_ready(
        complex_batchnorm2d(x, gamma_re, beta_re, gamma_im, beta_im,
                            single_pass_max_bytes=0))
    assert jnp.allclose(out_tiled, ref, atol=1e-4, rtol=1e-4)

    # --- shape 2: N=3, C=2, 8x64 (S=8 -> full-tile stats accumulate path) ----
    N2, C2, H2, W2 = 3, 2, 8, 64
    x2 = 0.7 * jax.random.normal(kx2, (N2, C2, H2, W2, 2), dtype=jnp.float32) + 1.5
    g2_re = gamma_re[:C2]; b2_re = beta_re[:C2]
    g2_im = gamma_im[:C2]; b2_im = beta_im[:C2]
    ref2 = _reference(x2, g2_re, b2_re, g2_im, b2_im)

    out2_fused = jax.block_until_ready(
        complex_batchnorm2d(x2, g2_re, b2_re, g2_im, b2_im))
    assert jnp.allclose(out2_fused, ref2, atol=1e-4, rtol=1e-4)

    out2_tiled = jax.block_until_ready(
        complex_batchnorm2d(x2, g2_re, b2_re, g2_im, b2_im,
                            single_pass_max_bytes=0))
    assert jnp.allclose(out2_tiled, ref2, atol=1e-4, rtol=1e-4)

    print("KERNEL_OK")
</pallas_src>

<mosaic_0001>
module attributes {stable_mosaic.version = 11 : i64} {
  func.func @_fused_kernel(%arg0: i32, %arg1: memref<1x2x128xf32, #tpu.memory_space<vmem>>, %arg2: memref<2x1x4x128xf32, #tpu.memory_space<vmem>>, %arg3: memref<2x1x4x128xf32, #tpu.memory_space<vmem>>) attributes {dimension_semantics = [#tpu.dimension_semantics<parallel>], iteration_bounds = array<i64: 4>, scalar_prefetch = 0 : i64, scratch_operands = 0 : i64, tpu.core_type = #tpu.core_type<tc>, window_params = [{transform_indices = @transform_0, window_bounds = array<i64: 1, 2, 128>}, {transform_indices = @transform_1, window_bounds = array<i64: 2, 1, 4, 128>}, {transform_indices = @transform_2, window_bounds = array<i64: 2, 1, 4, 128>}]} {
    %0 = tpu.iota {dimensions = array<i32: 1>} : vector<1x128xi32>
    %c2_i32 = arith.constant 2 : i32
    %c0_i32 = arith.constant 0 : i32
    %1 = arith.cmpi eq, %c2_i32, %c0_i32 : i32
    %c1_i32 = arith.constant 1 : i32
    %2 = arith.select %1, %c1_i32, %c2_i32 : i32
    %3 = vector.broadcast %2 : i32 to vector<1x128xi32>
    %4 = arith.remsi %0, %3 : vector<1x128xi32>
    %c0_i32_0 = arith.constant 0 : i32
    %5 = vector.broadcast %c0_i32_0 : i32 to vector<1x128xi32>
    %6 = arith.cmpi ne, %4, %5 : vector<1x128xi32>
    %c0_i32_1 = arith.constant 0 : i32
    %7 = vector.broadcast %c0_i32_1 : i32 to vector<1x128xi32>
    %8 = arith.cmpi slt, %4, %7 : vector<1x128xi32>
    %c0_i32_2 = arith.constant 0 : i32
    %9 = arith.cmpi slt, %2, %c0_i32_2 : i32
    %10 = vector.broadcast %9 : i1 to vector<1x128xi1>
    %11 = vector.broadcast %10 : vector<1x128xi1> to vector<1x128xi1>
    %12 = arith.xori %8, %11 : vector<1x128xi1>
    %13 = arith.andi %12, %6 : vector<1x128xi1>
    %14 = vector.broadcast %2 : i32 to vector<1x128xi32>
    %15 = arith.addi %4, %14 : vector<1x128xi32>
    %16 = arith.select %13, %15, %4 : vector<1x128xi1>, vector<1x128xi32>
    %c0_i32_3 = arith.constant 0 : i32
    %17 = vector.broadcast %c0_i32_3 : i32 to vector<1x128xi32>
    %18 = arith.cmpi eq, %16, %17 : vector<1x128xi32>
    %cst = arith.constant 0.000000e+00 : f32
    %19 = vector.broadcast %cst : f32 to vector<1x128xf32>
    %c0_i32_4 = arith.constant 0 : i32
    %20 = arith.index_cast %c0_i32_4 : i32 to index
    %c0 = arith.constant 0 : index
    %c0_5 = arith.constant 0 : index
    %c0_6 = arith.constant 0 : index
    %21 = vector.load %arg2[%20, %c0, %c0_5, %c0_6] : memref<2x1x4x128xf32, #tpu.memory_space<vmem>>, vector<1x1x4x128xf32>
    %22 = vector.shape_cast %21 : vector<1x1x4x128xf32> to vector<4x128xf32>
    %cst_7 = arith.constant dense<0.000000e+00> : vector<128xf32>
    %23 = vector.multi_reduction <add>, %22, %cst_7 [0] : vector<4x128xf32> to vector<128xf32>
    %24 = vector.shape_cast %23 : vector<128xf32> to vector<1x128xf32>
    %25 = arith.addf %19, %24 : vector<1x128xf32>
    %26 = arith.mulf %22, %22 : vector<4x128xf32>
    %cst_8 = arith.constant dense<0.000000e+00> : vector<128xf32>
    %27 = vector.multi_reduction <add>, %26, %cst_8 [0] : vector<4x128xf32> to vector<128xf32>
    %28 = vector.shape_cast %27 : vector<128xf32> to vector<1x128xf32>
    %29 = arith.addf %19, %28 : vector<1x128xf32>
    %c1_i32_9 = arith.constant 1 : i32
    %30 = arith.index_cast %c1_i32_9 : i32 to index
    %c0_10 = arith.constant 0 : index
    %c0_11 = arith.constant 0 : index
    %c0_12 = arith.constant 0 : index
    %31 = vector.load %arg2[%30, %c0_10, %c0_11, %c0_12] : memref<2x1x4x128xf32, #tpu.memory_space<vmem>>, vector<1x1x4x128xf32>
    %32 = vector.shape_cast %31 : vector<1x1x4x128xf32> to vector<4x128xf32>
    %cst_13 = arith.constant dense<0.000000e+00> : vector<128xf32>
    %33 = vector.multi_reduction <add>, %32, %cst_13 [0] : vector<4x128xf32> to vector<128xf32>
    %34 = vector.shape_cast %33 : vector<128xf32> to vector<1x128xf32>
    %35 = arith.addf %25, %34 : vector<1x128xf32>
    %36 = arith.mulf %32, %32 : vector<4x128xf32>
    %cst_14 = arith.constant dense<0.000000e+00> : vector<128xf32>
    %37 = vector.multi_reduction <add>, %36, %cst_14 [0] : vector<4x128xf32> to vector<128xf32>
    %38 = vector.shape_cast %37 : vector<128xf32> to vector<1x128xf32>
    %39 = arith.addf %29, %38 : vector<1x128xf32>
    %c2_i32_15 = arith.constant 2 : i32
    %cst_16 = arith.constant 0.000000e+00 : f32
    %40 = vector.broadcast %cst_16 : f32 to vector<1x128xf32>
    %41 = arith.select %18, %35, %40 : vector<1x128xi1>, vector<1x128xf32>
    %cst_17 = arith.constant dense<0.000000e+00> : vector<1xf32>
    %42 = vector.multi_reduction <add>, %41, %cst_17 [1] : vector<1x128xf32> to vector<1xf32>
    %43 = vector.shape_cast %42 : vector<1xf32> to vector<1x1xf32>
    %cst_18 = arith.constant 0.000000e+00 : f32
    %44 = vector.broadcast %cst_18 : f32 to vector<1x128xf32>
    %45 = arith.select %18, %44, %35 : vector<1x128xi1>, vector<1x128xf32>
    %cst_19 = arith.constant dense<0.000000e+00> : vector<1xf32>
    %46 = vector.multi_reduction <add>, %45, %cst_19 [1] : vector<1x128xf32> to vector<1xf32>
    %47 = vector.shape_cast %46 : vector<1xf32> to vector<1x1xf32>
    %48 = vector.shape_cast %43 : vector<1x1xf32> to vector<1x1xf32>
    %49 = vector.broadcast %48 : vector<1x1xf32> to vector<1x128xf32>
    %50 = vector.shape_cast %47 : vector<1x1xf32> to vector<1x1xf32>
    %51 = vector.broadcast %50 : vector<1x1xf32> to vector<1x128xf32>
    %52 = arith.select %18, %49, %51 : vector<1x128xi1>, vector<1x128xf32>
    %cst_20 = arith.constant 0.001953125 : f32
    %53 = vector.broadcast %cst_20 : f32 to vector<1x128xf32>
    %54 = arith.mulf %52, %53 : vector<1x128xf32>
    %cst_21 = arith.constant 0.000000e+00 : f32
    %55 = vector.broadcast %cst_21 : f32 to vector<1x128xf32>
    %56 = arith.select %18, %39, %55 : vector<1x128xi1>, vector<1x128xf32>
    %cst_22 = arith.constant dense<0.000000e+00> : vector<1xf32>
    %57 = vector.multi_reduction <add>, %56, %cst_22 [1] : vector<1x128xf32> to vector<1xf32>
    %58 = vector.shape_cast %57 : vector<1xf32> to vector<1x1xf32>
    %cst_23 = arith.constant 0.000000e+00 : f32
    %59 = vector.broadcast %cst_23 : f32 to vector<1x128xf32>
    %60 = arith.select %18, %59, %39 : vector<1x128xi1>, vector<1x128xf32>
    %cst_24 = arith.constant dense<0.000000e+00> : vector<1xf32>
    %61 = vector.multi_reduction <add>, %60, %cst_24 [1] : vector<1x128xf32> to vector<1xf32>
    %62 = vector.shape_cast %61 : vector<1xf32> to vector<1x1xf32>
    %63 = vector.shape_cast %58 : vector<1x1xf32> to vector<1x1xf32>
    %64 = vector.broadcast %63 : vector<1x1xf32> to vector<1x128xf32>
    %65 = vector.shape_cast %62 : vector<1x1xf32> to vector<1x1xf32>
    %66 = vector.broadcast %65 : vector<1x1xf32> to vector<1x128xf32>
    %67 = arith.select %18, %64, %66 : vector<1x128xi1>, vector<1x128xf32>
    %cst_25 = arith.constant 0.001953125 : f32
    %68 = vector.broadcast %cst_25 : f32 to vector<1x128xf32>
    %69 = arith.mulf %67, %68 : vector<1x128xf32>
    %70 = arith.mulf %54, %54 : vector<1x128xf32>
    %71 = arith.subf %69, %70 : vector<1x128xf32>
    %cst_26 = arith.constant 0.000000e+00 : f32
    %72 = vector.broadcast %cst_26 : f32 to vector<1x128xf32>
    %73 = arith.maximumf %71, %72 : vector<1x128xf32>
    %cst_27 = arith.constant 9.99999974E-6 : f32
    %74 = vector.broadcast %cst_27 : f32 to vector<1x128xf32>
    %75 = arith.addf %73, %74 : vector<1x128xf32>
    %76 = math.rsqrt %75 : vector<1x128xf32>
    %c0_28 = arith.constant 0 : index
    %c0_29 = arith.constant 0 : index
    %c0_30 = arith.constant 0 : index
    %77 = vector.load %arg1[%c0_28, %c0_29, %c0_30] : memref<1x2x128xf32, #tpu.memory_space<vmem>>, vector<1x1x128xf32>
    %78 = vector.shape_cast %77 : vector<1x1x128xf32> to vector<1x128xf32>
    %79 = arith.mulf %78, %76 : vector<1x128xf32>
    %c0_31 = arith.constant 0 : index
    %c1 = arith.constant 1 : index
    %c0_32 = arith.constant 0 : index
    %80 = vector.load %arg1[%c0_31, %c1, %c0_32] : memref<1x2x128xf32, #tpu.memory_space<vmem>>, vector<1x1x128xf32>
    %81 = vector.shape_cast %80 : vector<1x1x128xf32> to vector<1x128xf32>
    %82 = arith.mulf %54, %79 : vector<1x128xf32>
    %83 = arith.subf %81, %82 : vector<1x128xf32>
    %c0_i32_33 = arith.constant 0 : i32
    %84 = arith.index_cast %c0_i32_33 : i32 to index
    %c0_34 = arith.constant 0 : index
    %c0_35 = arith.constant 0 : index
    %c0_36 = arith.constant 0 : index
    %85 = vector.load %arg2[%84, %c0_34, %c0_35, %c0_36] : memref<2x1x4x128xf32, #tpu.memory_space<vmem>>, vector<1x1x4x128xf32>
    %86 = vector.shape_cast %85 : vector<1x1x4x128xf32> to vector<4x128xf32>
    %87 = vector.broadcast %79 : vector<1x128xf32> to vector<4x128xf32>
    %88 = arith.mulf %86, %87 : vector<4x128xf32>
    %89 = vector.broadcast %83 : vector<1x128xf32> to vector<4x128xf32>
    %90 = arith.addf %88, %89 : vector<4x128xf32>
    %91 = arith.index_cast %c0_i32_33 : i32 to index
    %c0_37 = arith.constant 0 : index
    %c0_38 = arith.constant 0 : index
    %c0_39 = arith.constant 0 : index
    %92 = vector.load %arg3[%91, %c0_37, %c0_38, %c0_39] : memref<2x1x4x128xf32, #tpu.memory_space<vmem>>, vector<1x1x4x128xf32>
    %93 = vector.shape_cast %92 : vector<1x1x4x128xf32> to vector<4x128xf32>
    %94 = vector.shape_cast %90 : vector<4x128xf32> to vector<1x1x4x128xf32>
    tpu.vector_store %arg3[%91, %c0_37, %c0_38, %c0_39], %94 {strides = array<i32>} : memref<2x1x4x128xf32, #tpu.memory_space<vmem>>, vector<1x1x4x128xf32>,
    %c1_i32_40 = arith.constant 1 : i32
    %95 = arith.index_cast %c1_i32_40 : i32 to index
    %c0_41 = arith.constant 0 : index
    %c0_42 = arith.constant 0 : index
    %c0_43 = arith.constant 0 : index
    %96 = vector.load %arg2[%95, %c0_41, %c0_42, %c0_43] : memref<2x1x4x128xf32, #tpu.memory_space<vmem>>, vector<1x1x4x128xf32>
    %97 = vector.shape_cast %96 : vector<1x1x4x128xf32> to vector<4x128xf32>
    %98 = vector.broadcast %79 : vector<1x128xf32> to vector<4x128xf32>
    %99 = arith.mulf %97, %98 : vector<4x128xf32>
    %100 = vector.broadcast %83 : vector<1x128xf32> to vector<4x128xf32>
    %101 = arith.addf %99, %100 : vector<4x128xf32>
    %102 = arith.index_cast %c1_i32_40 : i32 to index
    %c0_44 = arith.constant 0 : index
    %c0_45 = arith.constant 0 : index
    %c0_46 = arith.constant 0 : index
    %103 = vector.load %arg3[%102, %c0_44, %c0_45, %c0_46] : memref<2x1x4x128xf32, #tpu.memory_space<vmem>>, vector<1x1x4x128xf32>
    %104 = vector.shape_cast %103 : vector<1x1x4x128xf32> to vector<4x128xf32>
    %105 = vector.shape_cast %101 : vector<4x128xf32> to vector<1x1x4x128xf32>
    tpu.vector_store %arg3[%102, %c0_44, %c0_45, %c0_46], %105 {strides = array<i32>} : memref<2x1x4x128xf32, #tpu.memory_space<vmem>>, vector<1x1x4x128xf32>,
    %c2_i32_47 = arith.constant 2 : i32
    return
  }
  func.func @transform_0(%arg0: i32) -> (i32, i32, i32) {
    %c0_i32 = arith.constant 0 : i32
    %c0_i32_0 = arith.constant 0 : i32
    %c0_i32_1 = arith.constant 0 : i32
    return %arg0, %c0_i32, %c0_i32_0 : i32, i32, i32
  }
  func.func @transform_1(%arg0: i32) -> (i32, i32, i32, i32) {
    %c0_i32 = arith.constant 0 : i32
    %c0_i32_0 = arith.constant 0 : i32
    %c0_i32_1 = arith.constant 0 : i32
    %c0_i32_2 = arith.constant 0 : i32
    return %c0_i32, %arg0, %c0_i32_0, %c0_i32_1 : i32, i32, i32, i32
  }
  func.func @transform_2(%arg0: i32) -> (i32, i32, i32, i32) {
    %c0_i32 = arith.constant 0 : i32
    %c0_i32_0 = arith.constant 0 : i32
    %c0_i32_1 = arith.constant 0 : i32
    %c0_i32_2 = arith.constant 0 : i32
    return %c0_i32, %arg0, %c0_i32_0, %c0_i32_1 : i32, i32, i32, i32
  }
}

</mosaic_0001>

<llo_original>
// kernel: complex_batchnorm2d.1
$region0: #{complex_batchnorm2d.1}
  #allocation0 [shape = 'u32[]', space=smem, size = 0x4, offset = 0x4, fixed_abs, tag = 'smem constant byte address 0x4 - core index']
  #allocation1 [shape = 'u32[144,128]{1,0:T(1,128)}', space=vmem, size = 0x12000, scoped, tag = 'internal scratch']
  %s0 = inlined_call_operand.vmem [shape: f32[4,2,128], index: 0, kind: input, shape index: {}]
  %s1 = inlined_call_operand.vmem [shape: f32[2,4,4,128], index: 1, kind: input, shape index: {}]
  %s2 = inlined_call_operand.vmem [shape: f32[2,4,4,128], index: 2, kind: output, shape index: {}]
  %s3 = sld [smem:[#allocation0]]
  $region119: #{complex_batchnorm2d.1} parent=0
    _
  %s5 = ssub.s32 1, %s3
  %s6 = scalar_select 0, %s5, %s3
  $region1: #{complex_batchnorm2d.1} parent=0
    #allocation2 [shape = 'u8[8192]{0}', space=vmem, size = 0x2000, scoped, tag = 'input window, operand 1']
    #allocation3 [shape = 'u8[8192]{0}', space=vmem, size = 0x2000, scoped, tag = 'output window, operand 0']
    loop: start=0, step=1, limit=6
    $region2: #{complex_batchnorm2d.1} parent=1 // loop_pre_header
      _
    $region3: #{complex_batchnorm2d.1} parent=1 // loop_header
      %s8 = sphi 0, %s12
      %p9 = scmp.ge.s32.totalorder %s8, 6
      %s18 = sphi 0, %s20
      %s21 = sphi 0, %s18
      %s22 = sphi 0, %s21
      %s38 = sphi 0, %s22
      %s44 = sphi 0, %s46
      %s47 = sphi 0, %s44
      %s48 = sphi 0, %s47
      %s64 = sphi 0, %s48
      %s70 = sphi 0, %s72
      %s73 = sphi 0, %s70
      %s74 = sphi 0, %s73
      %s90 = sphi 0, %s74
    $region4: #{complex_batchnorm2d.1} parent=1 // loop_header_branch
      %11 = sbr.rel (%p9) target = $region8
    $region5: #{complex_batchnorm2d.1} parent=1 // loop_body
      %s13 = ssub.s32 %s8, 1
      %s14 = ssub.s32 %s8, 2
      %s15 = sadd.s32 %s8, 1
      %s16 = ssub.s32 %s8, %s15
      %p17 = scmp.eq.s32.totalorder %s16, 0
      %s19 = sadd.s32 %s18, 1
      %s20 = scalar_select %p17, %s18, %s19
      %p23 = pneg %p17
      %p24 = scmp.eq.s32.totalorder %s8, 3
      %p25 = por %p23, %p24
      %p26 = scmp.ne.s32.totalorder %s18, %s21
      %p27 = scmp.eq.s32.totalorder %s8, 0
      %p28 = por %p26, %p27
      %p29 = scmp.ne.s32.totalorder %s18, %s21
      %p30 = scmp.eq.s32.totalorder %s13, 3
      %p31 = por %p29, %p30
      %p32 = scmp.ne.s32.totalorder %s21, %s22
      %p33 = scmp.eq.s32.totalorder %s13, 0
      %p34 = por %p32, %p33
      %p35 = scmp.ne.s32.totalorder %s21, %s22
      %p36 = scmp.eq.s32.totalorder %s14, 3
      %p37 = por %p35, %p36
      %p39 = scmp.ne.s32.totalorder %s22, %s38
      %p40 = scmp.eq.s32.totalorder %s14, 0
      %p41 = por %p39, %p40
      %s42 = ssub.s32 %s8, %s15
      %p43 = scmp.eq.s32.totalorder %s42, 0
      %s45 = sadd.s32 %s44, 1
      %s46 = scalar_select %p43, %s44, %s45
      %p49 = pneg %p43
      %p50 = scmp.eq.s32.totalorder %s8, 3
      %p51 = por %p49, %p50
      %p52 = scmp.ne.s32.totalorder %s44, %s47
      %p53 = scmp.eq.s32.totalorder %s8, 0
      %p54 = por %p52, %p53
      %p55 = scmp.ne.s32.totalorder %s44, %s47
      %p56 = scmp.eq.s32.totalorder %s13, 3
      %p57 = por %p55, %p56
      %p58 = scmp.ne.s32.totalorder %s47, %s48
      %p59 = scmp.eq.s32.totalorder %s13, 0
      %p60 = por %p58, %p59
      %p61 = scmp.ne.s32.totalorder %s47, %s48
      %p62 = scmp.eq.s32.totalorder %s14, 3
      %p63 = por %p61, %p62
      %p65 = scmp.ne.s32.totalorder %s48, %s64
      %p66 = scmp.eq.s32.totalorder %s14, 0
      %p67 = por %p65, %p66
      %s68 = ssub.s32 %s8, %s15
      %p69 = scmp.eq.s32.totalorder %s68, 0
      %s71 = sadd.s32 %s70, 1
      %s72 = scalar_select %p69, %s70, %s71
      %p75 = pneg %p69
      %p76 = scmp.eq.s32.totalorder %s8, 3
      %p77 = por %p75, %p76
      %p78 = scmp.ne.s32.totalorder %s70, %s73
      %p79 = scmp.eq.s32.totalorder %s8, 0
      %p80 = por %p78, %p79
      %p81 = scmp.ne.s32.totalorder %s70, %s73
      %p82 = scmp.eq.s32.totalorder %s13, 3
      %p83 = por %p81, %p82
      %p84 = scmp.ne.s32.totalorder %s73, %s74
      %p85 = scmp.eq.s32.totalorder %s13, 0
      %p86 = por %p84, %p85
      %p87 = scmp.ne.s32.totalorder %s73, %s74
      %p88 = scmp.eq.s32.totalorder %s14, 3
      %p89 = por %p87, %p88
      %p91 = scmp.ne.s32.totalorder %s74, %s90
      %p92 = scmp.eq.s32.totalorder %s14, 0
      %p93 = por %p91, %p92
      %p94 = scmp.le.s32.totalorder 1, %s8
      %p95 = scmp.lt.s32.totalorder %s8, 5
      %p96 = pnand %p94, %p95
      %p97 = pneg %p96
      // Predicated region
      $region9: #{complex_batchnorm2d.1} parent=5 // pred_check
        _
      $region10: #{complex_batchnorm2d.1} parent=5 // pred_check_branch
        %99 = sbr.rel (%p96) target = $region12
      $region11: #{complex_batchnorm2d.1} parent=5 // pred_region
        %s100 = ssub.s32 %s8, 1
      $region12: #{complex_batchnorm2d.1} parent=5 // pred_fallthru
        _
      %p101 = scmp.lt.s32.totalorder %s8, 4
      // Predicated region
      $region13: #{complex_batchnorm2d.1} parent=5 // pred_check
        %p102 = pneg %p101
      $region14: #{complex_batchnorm2d.1} parent=5 // pred_check_branch
        %104 = sbr.rel (%p102) target = $region16
      $region15: #{complex_batchnorm2d.1} parent=5 // pred_region
        // Predicated region
        $region17: #{complex_batchnorm2d.1} parent=15 // pred_check
          %p105 = pneg %p28
        $region18: #{complex_batchnorm2d.1} parent=15 // pred_check_branch
          %107 = sbr.rel (%p105) target = $region20
        $region19: #{complex_batchnorm2d.1} parent=15 // pred_region
          %p108 = scmp.lt.s32.totalorder %s8, 3
          %s109 = scalar_select %p108, %s8, 3
          %s110 = smul.addr %s109, 2
          %s111 = scalar_lea.vmem %s0, %s110
        $region20: #{complex_batchnorm2d.1} parent=15 // pred_fallthru
          _
        // Predicated region
        $region21: #{complex_batchnorm2d.1} parent=15 // pred_check
          %p112 = pneg %p54
        $region22: #{complex_batchnorm2d.1} parent=15 // pred_check_branch
          %114 = sbr.rel (%p112) target = $region24
        $region23: #{complex_batchnorm2d.1} parent=15 // pred_region
          %s115 = sand.u32 %s44, 1
          %s116 = sand.u32 %s44, 1
          %s117 = smul.addr %s116, 8
          %s118 = scalar_lea.vmem [#allocation2], %s117
          %s119 = smul.addr %s8, 4
          %s120 = scalar_lea.vmem %s1, %s119
          // Predicated region
          $region25: #{complex_batchnorm2d.1} parent=23 // pred_check
            _
          $region26: #{complex_batchnorm2d.1} parent=23 // pred_check_branch
            %122 = sbr.rel (0) target = $region28
          $region27: #{complex_batchnorm2d.1} parent=23 // pred_region
            // Predicated region
            $region29: #{complex_batchnorm2d.1} parent=27 // pred_check
              _
            $region30: #{complex_batchnorm2d.1} parent=27 // pred_check_branch
              %124 = sbr.rel target = $region32
            $region31: #{complex_batchnorm2d.1} parent=27 // pred_region
              // Predicated region
              $region44: #{complex_batchnorm2d.1} parent=31 // pred_check
                _
              $region45: #{complex_batchnorm2d.1} parent=31 // pred_check_branch
                %141 = sbr.rel (0) target = $region47
              $region46: #{complex_batchnorm2d.1} parent=31 // pred_region
                loop: start=0, step=1, limit=1
                $region48: #{complex_batchnorm2d.1} parent=46 // loop_pre_header
                  _
                $region49: #{complex_batchnorm2d.1} parent=46 // loop_header
                  %s143 = sphi 0, %s147
                  %p144 = scmp.ge.s32.totalorder %s143, 1
                  %s148 = sphi %s120, %s120
                  %s149 = sphi %s118, %s118
                $region50: #{complex_batchnorm2d.1} parent=46 // loop_header_branch
                  %146 = sbr.rel (%p144) target = $region54
                $region51: #{complex_batchnorm2d.1} parent=46 // loop_body
                  _
                $region52: #{complex_batchnorm2d.1} parent=46 // loop_footer
                  %s147 = sadd.s32 1, %s143
                $region53: #{complex_batchnorm2d.1} parent=46 // loop_footer_branch
                  %142 = sbr.rel target = $region49
                $region54: #{complex_batchnorm2d.1} parent=46 // loop_exit
                  _
                loop: start=0, step=1, limit=1
                $region55: #{complex_batchnorm2d.1} parent=46 // loop_pre_header
                  _
                $region56: #{complex_batchnorm2d.1} parent=46 // loop_header
                  %s152 = sphi 0, %s156
                  %p153 = scmp.ge.s32.totalorder %s152, 1
                  %s157 = sphi %s120, %s120
                  %s158 = sphi %s118, %s118
                $region57: #{complex_batchnorm2d.1} parent=46 // loop_header_branch
                  %155 = sbr.rel (%p153) target = $region61
                $region58: #{complex_batchnorm2d.1} parent=46 // loop_body
                  %v159 = vld [vmem:[%s157] sm:$0xf]
                  %160 = vst [vmem:[%s158] sm:$0xf] %v159
                  %v161 = vld [vmem:[%s157 + $0x10] sm:$0xf]
                  %162 = vst [vmem:[%s158 + $0x4] sm:$0xf] %v161
                $region59: #{complex_batchnorm2d.1} parent=46 // loop_footer
                  %s156 = sadd.s32 1, %s152
                $region60: #{complex_batchnorm2d.1} parent=46 // loop_footer_branch
                  %151 = sbr.rel target = $region56
                $region61: #{complex_batchnorm2d.1} parent=46 // loop_exit
                  _
              $region47: #{complex_batchnorm2d.1} parent=31 // pred_fallthru
                _
            $region32: #{complex_batchnorm2d.1} parent=27 // pred_fallthru
              _
            // Predicated region
            $region33: #{complex_batchnorm2d.1} parent=27 // pred_check
              _
            $region34: #{complex_batchnorm2d.1} parent=27 // pred_check_branch
              %126 = sbr.rel (0) target = $region36
            $region35: #{complex_batchnorm2d.1} parent=27 // pred_region
              loop: start=0, step=1, limit=1
              $region37: #{complex_batchnorm2d.1} parent=35 // loop_pre_header
                _
              $region38: #{complex_batchnorm2d.1} parent=35 // loop_header
                %s129 = sphi 0, %s133
                %p130 = scmp.ge.s32.totalorder %s129, 1
                %s134 = sphi %s120, %s120
                %s135 = sphi %s118, %s118
              $region39: #{complex_batchnorm2d.1} parent=35 // loop_header_branch
                %132 = sbr.rel (%p130) target = $region43
              $region40: #{complex_batchnorm2d.1} parent=35 // loop_body
                %v136 = vld [vmem:[%s134] sm:$0xf]
                %137 = vst [vmem:[%s135] sm:$0xf] %v136
                %v138 = vld [vmem:[%s134 + $0x10] sm:$0xf]
                %139 = vst [vmem:[%s135 + $0x4] sm:$0xf] %v138
              $region41: #{complex_batchnorm2d.1} parent=35 // loop_footer
                %s133 = sadd.s32 1, %s129
              $region42: #{complex_batchnorm2d.1} parent=35 // loop_footer_branch
                %128 = sbr.rel target = $region38
              $region43: #{complex_batchnorm2d.1} parent=35 // loop_exit
                _
            $region36: #{complex_batchnorm2d.1} parent=27 // pred_fallthru
              _
          $region28: #{complex_batchnorm2d.1} parent=23 // pred_fallthru
            _
          %163 = vnop
        $region24: #{complex_batchnorm2d.1} parent=15 // pred_fallthru
          _
      $region16: #{complex_batchnorm2d.1} parent=5 // pred_fallthru
        _
      %p164 = scmp.le.s32.totalorder 1, %s8
      %p165 = scmp.lt.s32.totalorder %s8, 5
      %p166 = pnand %p164, %p165
      %p167 = pneg %p166
      // Predicated region
      $region62: #{complex_batchnorm2d.1} parent=5 // pred_check
        _
      $region63: #{complex_batchnorm2d.1} parent=5 // pred_check_branch
        %169 = sbr.rel (%p166) target = $region65
      $region64: #{complex_batchnorm2d.1} parent=5 // pred_region
        %s170 = ssub.s32 %s8, 1
        %s171 = sand.u32 %s47, 1
        %s172 = sand.u32 %s47, 1
        %s173 = smul.addr %s172, 8
        %s174 = scalar_lea.vmem [#allocation2], %s173
        // Predicated region
        $region66: #{complex_batchnorm2d.1} parent=64 // pred_check
          %p175 = pneg %p60
        $region67: #{complex_batchnorm2d.1} parent=64 // pred_check_branch
          %177 = sbr.rel (%p175) target = $region69
        $region68: #{complex_batchnorm2d.1} parent=64 // pred_region
          _
        $region69: #{complex_batchnorm2d.1} parent=64 // pred_fallthru
          _
        %p178 = scmp.lt.s32.totalorder %s13, 3
        %s179 = scalar_select %p178, %s13, 3
        %s180 = smul.addr %s179, 2
        %s181 = scalar_lea.vmem %s0, %s180
        %p182 = pneg %p34
        %p183 = pneg %p31
        %s184 = sand.u32 %s47, 1
        %s185 = sand.u32 %s47, 1
        %s186 = smul.addr %s185, 8
        %s187 = scalar_lea.vmem [#allocation2], %s186
        %p188 = pneg %p60
        %p189 = pneg %p57
        %p190 = pneg %p86
        %p191 = pneg %p83
        %s192 = sand.u32 %s73, 1
        %s193 = sand.u32 %s73, 1
        %s194 = smul.addr %s193, 8
        %s195 = scalar_lea.vmem [#allocation3], %s194
        %p196 = scmp.lt.s32.totalorder %s13, 3
        %s197 = scalar_select %p196, %s13, 3
        %s198 = smul.addr %s197, 2
        %s199 = scalar_lea.vmem %s0, %s198
        %v200 = vlaneseq
        %v201 = vand.u32 %v200, 127
        %vm202 = vcmp.lt.s32.totalorder %v201, 0
        %v203 = vsub.s32 0, %v201
        %v204 = vsel %vm202, %v203, %v201
        %v205 = vshrl.u32 %v204, 1
        %v206 = vand.u32 %v204, 1
        %v207 = vsub.s32 0, %v206
        %v208 = vsel %vm202, %v207, %v206
        %vm209 = vcmp.ne.s32.totalorder %v208, 0
        %vm210 = vcmp.lt.s32.totalorder %v208, 0
        %vm211 = vmand %vm210, %vm209
        %v212 = vadd.s32 %v208, 2
        %v213 = vsel %vm211, %v212, %v208
        %vm214 = vcmp.eq.s32.totalorder %v213, 0
        %v215 = vld [vmem:[%s174] sm:$0xf]
        %vm216 = vcmask 1043456
        %v217 = vsel %vm216, %v215, 0.0
        %v218 = vrot.slane %v217, 4
        %v219 = vadd.f32 %v217, %v218
        %v220 = vrot.slane %v219, 2
        %v221 = vadd.f32 %v219, %v220
        %v222 = vrot.slane %v221, 1
        %v223 = vadd.f32 %v221, %v222
        %v224 = vadd.f32 %v223, 0.0
        %v225 = vmul.f32 %v215, %v215
        %v226 = vsel %vm216, %v225, 0.0
        %v227 = vrot.slane %v226, 4
        %v228 = vadd.f32 %v226, %v227
        %v229 = vrot.slane %v228, 2
        %v230 = vadd.f32 %v228, %v229
        %v231 = vrot.slane %v230, 1
        %v232 = vadd.f32 %v230, %v231
        %v233 = vadd.f32 %v232, 0.0
        %s234 = scalar_lea.vmem %s174, 4 [#allocation2]
        %v235 = vld [vmem:[%s234] sm:$0xf]
        %v236 = vsel %vm216, %v235, 0.0
        %v237 = vrot.slane %v236, 4
        %v238 = vadd.f32 %v236, %v237
        %v239 = vrot.slane %v238, 2
        %v240 = vadd.f32 %v238, %v239
        %v241 = vrot.slane %v240, 1
        %v242 = vadd.f32 %v240, %v241
        %v243 = vadd.f32 %v224, %v242
        %v244 = vmul.f32 %v235, %v235
        %v245 = vsel %vm216, %v244, 0.0
        %v246 = vrot.slane %v245, 4
        %v247 = vadd.f32 %v245, %v246
        %v248 = vrot.slane %v247, 2
        %v249 = vadd.f32 %v247, %v248
        %v250 = vrot.slane %v249, 1
        %v251 = vadd.f32 %v249, %v250
        %v252 = vadd.f32 %v233, %v251
        %v253 = vsel %vm214, %v243, 0.0
        %254 = vadd.xlane.f32.xlu0 %v253
        %v255 = vpop.xlane.xlu0 %254
        %v256 = vsel %vm214, 0.0, %v243
        %257 = vadd.xlane.f32.xlu0 %v256
        %v258 = vpop.xlane.xlu0 %257
        %v259 = vsel %vm214, %v255, %v258
        %v260 = vmul.f32 %v259, 0.001953125
        %v261 = vsel %vm214, %v252, 0.0
        %262 = vadd.xlane.f32.xlu0 %v261
        %v263 = vpop.xlane.xlu0 %262
        %v264 = vsel %vm214, 0.0, %v252
        %265 = vadd.xlane.f32.xlu0 %v264
        %v266 = vpop.xlane.xlu0 %265
        %v267 = vsel %vm214, %v263, %v266
        %v268 = vmul.f32 %v267, 0.001953125
        %v269 = vmul.f32 %v260, %v260
        %v270 = vsub.f32 %v268, %v269
        %v271 = vmax.f32 %v270, 0.0
        %v272 = vadd.f32 %v271, 1e-05
        %v273 = vrsqrt.pop %v272
        %v274 = vld [vmem:[%s199] sm:$0x1]
        %v275 = vmul.f32 %v274, %v273
        %v276 = vld [vmem:[%s199 + $0x1] sm:$0x1]
        %v277 = vmul.f32 %v260, %v275
        %v278 = vsub.f32 %v276, %v277
        %v279 = vlaneseq
        %v280 = vshrl.u32 %v279, 7
        %v281 = vsub.s32 0, %v280
        %v282 = vrot.slane %v275, %v281
        %v283 = vmul.f32 %v215, %v282
        %v284 = vlaneseq
        %v285 = vshrl.u32 %v284, 7
        %v286 = vsub.s32 0, %v285
        %v287 = vrot.slane %v278, %v286
        %v288 = vadd.f32 %v283, %v287
        %289 = vst [vmem:[%s195] sm:$0xf] %v288
        %v290 = vld [vmem:[%s234] sm:$0xf]
        %v291 = vmul.f32 %v290, %v282
        %v292 = vadd.f32 %v291, %v287
        %s293 = scalar_lea.vmem %s195, 4 [#allocation3]
        %294 = vst [vmem:[%s293] sm:$0xf] %v292
        %s295 = sand.u32 %s73, 1
        %s296 = sand.u32 %s73, 1
        %s297 = smul.addr %s296, 8
        %s298 = scalar_lea.vmem [#allocation3], %s297
        // Predicated region
        $region70: #{complex_batchnorm2d.1} parent=64 // pred_check
          %p299 = pneg %p83
        $region71: #{complex_batchnorm2d.1} parent=64 // pred_check_branch
          %301 = sbr.rel (%p299) target = $region73
        $region72: #{complex_batchnorm2d.1} parent=64 // pred_region
          %s302 = smul.addr %s13, 4
          %s303 = scalar_lea.vmem %s2, %s302
          // Predicated region
          $region74: #{complex_batchnorm2d.1} parent=72 // pred_check
            _
          $region75: #{complex_batchnorm2d.1} parent=72 // pred_check_branch
            %305 = sbr.rel (0) target = $region77
          $region76: #{complex_batchnorm2d.1} parent=72 // pred_region
            // Predicated region
            $region78: #{complex_batchnorm2d.1} parent=76 // pred_check
              _
            $region79: #{complex_batchnorm2d.1} parent=76 // pred_check_branch
              %307 = sbr.rel target = $region81
            $region80: #{complex_batchnorm2d.1} parent=76 // pred_region
              // Predicated region
              $region93: #{complex_batchnorm2d.1} parent=80 // pred_check
                _
              $region94: #{complex_batchnorm2d.1} parent=80 // pred_check_branch
                %324 = sbr.rel (0) target = $region96
              $region95: #{complex_batchnorm2d.1} parent=80 // pred_region
                loop: start=0, step=1, limit=1
                $region97: #{complex_batchnorm2d.1} parent=95 // loop_pre_header
                  _
                $region98: #{complex_batchnorm2d.1} parent=95 // loop_header
                  %s326 = sphi 0, %s330
                  %p327 = scmp.ge.s32.totalorder %s326, 1
                  %s331 = sphi %s298, %s298
                  %s332 = sphi %s303, %s303
                $region99: #{complex_batchnorm2d.1} parent=95 // loop_header_branch
                  %329 = sbr.rel (%p327) target = $region103
                $region100: #{complex_batchnorm2d.1} parent=95 // loop_body
                  _
                $region101: #{complex_batchnorm2d.1} parent=95 // loop_footer
                  %s330 = sadd.s32 1, %s326
                $region102: #{complex_batchnorm2d.1} parent=95 // loop_footer_branch
                  %325 = sbr.rel target = $region98
                $region103: #{complex_batchnorm2d.1} parent=95 // loop_exit
                  _
                loop: start=0, step=1, limit=1
                $region104: #{complex_batchnorm2d.1} parent=95 // loop_pre_header
                  _
                $region105: #{complex_batchnorm2d.1} parent=95 // loop_header
                  %s335 = sphi 0, %s339
                  %p336 = scmp.ge.s32.totalorder %s335, 1
                  %s340 = sphi %s298, %s298
                  %s341 = sphi %s303, %s303
                $region106: #{complex_batchnorm2d.1} parent=95 // loop_header_branch
                  %338 = sbr.rel (%p336) target = $region110
                $region107: #{complex_batchnorm2d.1} parent=95 // loop_body
                  %v342 = vld [vmem:[%s340] sm:$0xf]
                  %343 = vst [vmem:[%s341] sm:$0xf] %v342
                  %v344 = vld [vmem:[%s340 + $0x4] sm:$0xf]
                  %345 = vst [vmem:[%s341 + $0x10] sm:$0xf] %v344
                $region108: #{complex_batchnorm2d.1} parent=95 // loop_footer
                  %s339 = sadd.s32 1, %s335
                $region109: #{complex_batchnorm2d.1} parent=95 // loop_footer_branch
                  %334 = sbr.rel target = $region105
                $region110: #{complex_batchnorm2d.1} parent=95 // loop_exit
                  _
              $region96: #{complex_batchnorm2d.1} parent=80 // pred_fallthru
                _
            $region81: #{complex_batchnorm2d.1} parent=76 // pred_fallthru
              _
            // Predicated region
            $region82: #{complex_batchnorm2d.1} parent=76 // pred_check
              _
            $region83: #{complex_batchnorm2d.1} parent=76 // pred_check_branch
              %309 = sbr.rel (0) target = $region85
            $region84: #{complex_batchnorm2d.1} parent=76 // pred_region
              loop: start=0, step=1, limit=1
              $region86: #{complex_batchnorm2d.1} parent=84 // loop_pre_header
                _
              $region87: #{complex_batchnorm2d.1} parent=84 // loop_header
                %s312 = sphi 0, %s316
                %p313 = scmp.ge.s32.totalorder %s312, 1
                %s317 = sphi %s298, %s298
                %s318 = sphi %s303, %s303
              $region88: #{complex_batchnorm2d.1} parent=84 // loop_header_branch
                %315 = sbr.rel (%p313) target = $region92
              $region89: #{complex_batchnorm2d.1} parent=84 // loop_body
                %v319 = vld [vmem:[%s317] sm:$0xf]
                %320 = vst [vmem:[%s318] sm:$0xf] %v319
                %v321 = vld [vmem:[%s317 + $0x4] sm:$0xf]
                %322 = vst [vmem:[%s318 + $0x10] sm:$0xf] %v321
              $region90: #{complex_batchnorm2d.1} parent=84 // loop_footer
                %s316 = sadd.s32 1, %s312
              $region91: #{complex_batchnorm2d.1} parent=84 // loop_footer_branch
                %311 = sbr.rel target = $region87
              $region92: #{complex_batchnorm2d.1} parent=84 // loop_exit
                _
            $region85: #{complex_batchnorm2d.1} parent=76 // pred_fallthru
              _
          $region77: #{complex_batchnorm2d.1} parent=72 // pred_fallthru
            _
          %346 = vnop
        $region73: #{complex_batchnorm2d.1} parent=64 // pred_fallthru
          _
      $region65: #{complex_batchnorm2d.1} parent=5 // pred_fallthru
        _
      %p347 = scmp.le.s32.totalorder 2, %s8
      // Predicated region
      $region111: #{complex_batchnorm2d.1} parent=5 // pred_check
        %p348 = pneg %p347
      $region112: #{complex_batchnorm2d.1} parent=5 // pred_check_branch
        %350 = sbr.rel (%p348) target = $region114
      $region113: #{complex_batchnorm2d.1} parent=5 // pred_region
        %s351 = ssub.s32 %s8, 2
        // Predicated region
        $region115: #{complex_batchnorm2d.1} parent=113 // pred_check
          %p352 = pneg %p89
        $region116: #{complex_batchnorm2d.1} parent=113 // pred_check_branch
          %354 = sbr.rel (%p352) target = $region118
        $region117: #{complex_batchnorm2d.1} parent=113 // pred_region
          %s355 = sand.u32 %s74, 1
          %s356 = sand.u32 %s74, 1
          %s357 = smul.addr %s356, 8
          %s358 = scalar_lea.vmem [#allocation3], %s357
        $region118: #{complex_batchnorm2d.1} parent=113 // pred_fallthru
          _
      $region114: #{complex_batchnorm2d.1} parent=5 // pred_fallthru
        _
    $region6: #{complex_batchnorm2d.1} parent=1 // loop_footer
      %s12 = sadd.s32 1, %s8
    $region7: #{complex_batchnorm2d.1} parent=1 // loop_footer_branch
      %7 = sbr.rel target = $region3
    $region8: #{complex_batchnorm2d.1} parent=1 // loop_exit
      _

</llo_original>
